<compile_context>
chip_gen: v6e
topology: v6e:2x2x1
jax: 0.10.0
libtpu: 0.0.40
codegen_flags: <defaults>
</compile_context>

<pallas_src>
import functools
import math

import jax
import jax.numpy as jnp
from jax.experimental import pallas as pl
from jax.experimental.pallas import tpu as pltpu


# --------------------------------------------------------------------------- #
# Kernel
# --------------------------------------------------------------------------- #
def _attention_kernel(x_ref, w1_ref, b1_ref, w2_ref, out_ref, *,
                      seq_len, chunk_b, matmul_dtype):
    # x_ref:   (bt*S, D)   flattened rows of the current batch block
    # w1_ref:  (D, H), b1_ref: (1, H)   -- fc weights (pre-transposed)
    # w2_ref:  (1, H)                    -- fc2 weights as a row vector
    # out_ref: (1, bt, S)                -- lane-dense softmax block (seq on lanes)
    bt = out_ref.shape[1]
    n_chunks = bt // chunk_b
    chunk_rows = chunk_b * seq_len

    w1 = w1_ref[...]
    b1 = b1_ref[...]
    w2 = w2_ref[...]

    def compute(xb):
        # xb: (chunk_rows, D) -> (chunk_b, S) softmax weights.
        if matmul_dtype is not None:
            xb = xb.astype(matmul_dtype)           # in-kernel cast (VPU), hidden under DMA
        # fc + relu: one MXU matmul, f32 accumulate.
        h = jnp.dot(xb, w1, preferred_element_type=jnp.float32)   # (chunk_rows, H)
        h = jnp.maximum(h + b1, 0.0)
        # fc2 (out_features=1): VPU multiply + XLU lane reduce instead of an
        # N=1 MXU matmul.  b2 omitted: softmax is shift-invariant.
        scores = jnp.sum((h * w2).reshape(chunk_b, seq_len, -1), axis=-1)  # (chunk_b, S)
        # softmax over the sequence axis (lane axis here).
        m = jnp.max(scores, axis=-1, keepdims=True)
        e = jnp.exp(scores - m)
        denom = jnp.sum(e, axis=-1, keepdims=True)
        inv = pl.reciprocal(denom, approx=True)    # EUP slot (rows sum to ~1 +/- 2^-12)
        return (e * inv).astype(out_ref.dtype)

    if n_chunks == 1:
        out_ref[0] = compute(x_ref[...])
    else:
        r_align = chunk_rows & -chunk_rows          # power-of-2 alignment hints
        b_align = chunk_b & -chunk_b

        def body(c, carry):
            r0 = pl.multiple_of(c * chunk_rows, r_align)
            b0 = pl.multiple_of(c * chunk_b, b_align)
            out_ref[0, pl.ds(b0, chunk_b), :] = compute(x_ref[pl.ds(r0, chunk_rows), :])
            return carry

        jax.lax.fori_loop(0, n_chunks, body, 0, unroll=(n_chunks <= 8))


# --------------------------------------------------------------------------- #
# Blocking heuristics
# --------------------------------------------------------------------------- #
def _cdiv(a, b):
    return -(-a // b)


def _round_up(n, m):
    return _cdiv(n, m) * m


def _tpu_caps():
    """Best-effort (vmem_capacity_bytes, multi_tensorcore) query.

    Falls back conservatively (64 MiB, multi-core inferred from device_kind).
    """
    vmem_cap = None
    try:
        vmem_cap = int(pltpu.get_tpu_info().vmem_capacity_bytes)
    except Exception:
        pass
    kind = ""
    try:
        kind = jax.devices()[0].device_kind.lower()
    except Exception:
        pass
    multi_core = "v7" in kind                       # v7x: 2 TensorCores / chip
    if vmem_cap is None:
        vmem_cap = (64 << 20) if multi_core else (128 << 20)
    return vmem_cap, multi_core


def _pick_blocking(B, S, D, H, x_bytes, w_bytes, vmem_cap, multi_core):
    """Choose (block_b, chunk_b): batch rows per grid step / per in-kernel chunk.

    Blocks are sized by bytes (~2 MiB of x per step) so per-step pipeline
    overhead is amortized; the in-kernel chunk keeps (chunk_b*S, H) f32
    intermediates small.  The block is capped by a generation-aware VMEM
    budget, and the >=2-grid-step rule only applies on multi-TC chips.
    """
    # ~512 fc-matmul rows per in-kernel chunk, whole softmax rows only.
    chunk_b = max(1, min(B, 512 // max(S, 1)))

    # x-block byte target (~2 MiB), in whole chunks.
    row_bytes = S * D * x_bytes
    bt = max(chunk_b, ((2 << 20) // max(row_bytes, 1) // chunk_b) * chunk_b)

    # Generation-aware VMEM cap: double-buffered x + resident weights +
    # per-chunk f32 intermediates + double-buffered output block.
    per_bt = 2 * S * D * x_bytes + 2 * S * 4
    fixed = D * H * w_bytes + 2 * H * 4 + 3 * chunk_b * S * H * 4
    budget = int(0.6 * vmem_cap)
    if fixed + chunk_b * per_bt > budget:
        bt = chunk_b
    else:
        bt = min(bt, max(chunk_b, ((budget - fixed) // per_bt // chunk_b) * chunk_b))

    single = _round_up(B, chunk_b)                  # one step over the whole (padded) batch
    if multi_core and B >= 2 * chunk_b:
        # v7x megacore: keep >= 2 grid steps so both TensorCores get work.
        bt = min(bt, _round_up(_cdiv(B, 2), chunk_b))
    bt = min(bt, single)

    if bt < single:
        # Multi-step grid: the (bt*S, D) x block's sublane dim must be a
        # multiple of the dtype packing (8 f32 / 16 bf16 / 32 int8).
        pack = 32 // x_bytes
        bt *= pack // math.gcd(bt * S, pack)
        bt = min(bt, single)
    return bt, chunk_b


# --------------------------------------------------------------------------- #
# Wrapper
# --------------------------------------------------------------------------- #
def attention_pallas(x, w1, b1, w2, b2=None, *, block_b=None, chunk_b=None,
                     matmul_dtype=None):
    """x: (B, S, D).  PyTorch Linear layouts: w1 (H, D), b1 (H,), w2 (1, H), b2 (1,).

    b2 is accepted for API parity but unused: softmax over dim=1 is
    shift-invariant, so the scalar fc2 bias cannot change the output.
    matmul_dtype: optional narrow dtype (e.g. jnp.bfloat16) for the fc-matmul
    inputs; x is cast INSIDE the kernel (no extra HBM pass), accumulation and
    the softmax stay f32.
    """
    del b2  # softmax shift-invariance: mathematically a no-op.
    B, S, D = x.shape
    H = w1.shape[0]
    x_bytes = jnp.dtype(x.dtype).itemsize
    w_dtype = matmul_dtype if matmul_dtype is not None else w1.dtype
    w_bytes = jnp.dtype(w_dtype).itemsize

    vmem_cap, multi_core = _tpu_caps()
    auto_bt, auto_cb = _pick_blocking(B, S, D, H, x_bytes, w_bytes, vmem_cap, multi_core)
    bt = auto_bt if block_b is None else int(block_b)
    cb = auto_cb if chunk_b is None else int(chunk_b)
    cb = max(1, min(cb, bt))
    if bt % cb:
        raise ValueError(f"block_b={bt} must be a multiple of chunk_b={cb}")

    G = _cdiv(B, bt)
    B_pad = G * bt
    if G > 1 and (bt * S) % (32 // x_bytes):
        raise ValueError(
            f"block_b*S={bt * S} must be a multiple of {32 // x_bytes} "
            f"(sublane packing for {x.dtype}) when the grid has >1 step")

    # Glue (plain JAX, metadata-only where possible): 2-D x layout + pad batch.
    x_flat = x.reshape(B * S, D)
    if B_pad != B:
        # Padded rows get an independent (discarded) softmax; zeros are safe.
        x_flat = jnp.pad(x_flat, ((0, (B_pad - B) * S), (0, 0)))

    w1_t = jnp.transpose(w1)                        # (D, H)
    if matmul_dtype is not None:
        w1_t = w1_t.astype(matmul_dtype)            # tiny resident operand
    b1_2d = b1.reshape(1, H).astype(jnp.float32)    # (1, H)
    w2_row = w2.reshape(1, H).astype(jnp.float32)   # (1, H) row vector

    # Scoped-VMEM budget: no artificial floor; capped by the chip's capacity.
    vmem_est = (2 * bt * S * D * x_bytes            # x block (double-buffered)
                + D * H * w_bytes + 2 * H * 4       # resident weights / bias
                + 3 * cb * S * H * 4                # per-chunk f32 intermediates
                + 2 * bt * S * 4)                   # output block (double-buffered)
    vmem_limit = int(min(int(0.75 * vmem_cap), max(8 << 20, 2 * vmem_est)))

    cost = pl.CostEstimate(
        flops=2 * B_pad * S * D * H + 4 * B_pad * S * H + 6 * B_pad * S,
        transcendentals=B_pad * S + B_pad,          # exp per score + 1/denom per row
        bytes_accessed=(B_pad * S * D * x_bytes + D * H * w_bytes + 2 * H * 4
                        + B_pad * S * 4),
    )

    kernel = functools.partial(_attention_kernel, seq_len=S, chunk_b=cb,
                               matmul_dtype=matmul_dtype)
    const = dict(pipeline_mode=pl.Buffered(1))      # weights never change across the grid

    out = pl.pallas_call(
        kernel,
        out_shape=jax.ShapeDtypeStruct((G, bt, S), jnp.float32),
        grid_spec=pltpu.PrefetchScalarGridSpec(
            num_scalar_prefetch=0,
            grid=(G,),
            in_specs=[
                # x is the only streaming operand; if profiling shows exposed
                # DMA, sweep pipeline_mode=pl.Buffered(3) here (watch v7x VMEM).
                pl.BlockSpec((bt * S, D), lambda g: (g, 0)),                 # x rows
                pl.BlockSpec((D, H), lambda g: (0, 0), **const),             # W1
                pl.BlockSpec((1, H), lambda g: (0, 0), **const),             # b1
                pl.BlockSpec((1, H), lambda g: (0, 0), **const),             # W2 row
            ],
            out_specs=pl.BlockSpec((1, bt, S), lambda g: (g, 0, 0)),         # lane-dense
        ),
        compiler_params=pltpu.CompilerParams(
            dimension_semantics=("parallel",),
            vmem_limit_bytes=vmem_limit,
        ),
        cost_estimate=cost,
    )(x_flat, w1_t, b1_2d, w2_row)

    # (G, bt, S) is row-major-identical to (B_pad, S); drop padding, restore (B, S, 1).
    out = out.reshape(B_pad, S)[:B].reshape(B, S, 1)
    return out.astype(x.dtype)


def attention_ref(x, w1, b1, w2, b2):
    """Pure-JAX reference mirroring the PyTorch forward."""
    h = jax.nn.relu(jnp.einsum("bsd,hd->bsh", x, w1) + b1)
    s = jnp.einsum("bsh,oh->bso", h, w2) + b2          # (B, S, 1)
    return jax.nn.softmax(s, axis=1)


# --------------------------------------------------------------------------- #
# Self-test
# --------------------------------------------------------------------------- #
if __name__ == "__main__":
    B, S, INPUT_SIZE, HIDDEN_SIZE = 8, 8, 32, 32

    key = jax.random.PRNGKey(0)
    kx, kw1, kb1, kw2, kb2 = jax.random.split(key, 5)

    x = jax.random.normal(kx, (B, S, INPUT_SIZE), dtype=jnp.float32)
    # PyTorch Linear shapes: weight (out, in), bias (out,)
    w1 = jax.random.normal(kw1, (HIDDEN_SIZE, INPUT_SIZE), dtype=jnp.float32) * 0.1
    b1 = jax.random.normal(kb1, (HIDDEN_SIZE,), dtype=jnp.float32) * 0.1
    w2 = jax.random.normal(kw2, (1, HIDDEN_SIZE), dtype=jnp.float32) * 0.1
    b2 = jax.random.normal(kb2, (1,), dtype=jnp.float32) * 0.1

    alpha_ref = attention_ref(x, w1, b1, w2, b2)

    # 1) Auto blocking (single grid step at this size), f32 matmul.
    alpha = jax.block_until_ready(attention_pallas(x, w1, b1, w2, b2))
    assert alpha.shape == (B, S, 1)
    assert jnp.allclose(alpha, alpha_ref, atol=2e-3, rtol=2e-3), "f32 auto path mismatch"

    # 2) Multi-step grid + in-kernel chunk loop (G=2, n_chunks=2).
    alpha_blk = jax.block_until_ready(
        attention_pallas(x, w1, b1, w2, b2, block_b=4, chunk_b=2))
    assert jnp.allclose(alpha_blk, alpha_ref, atol=2e-3, rtol=2e-3), "blocked path mismatch"

    # 3) Non-dividing block -> batch padding path (G=3, B padded 8->9).
    alpha_pad = jax.block_until_ready(
        attention_pallas(x, w1, b1, w2, b2, block_b=3, chunk_b=3))
    assert jnp.allclose(alpha_pad, alpha_ref, atol=2e-3, rtol=2e-3), "padded path mismatch"

    # 4) bf16 MXU-input path (cast inside the kernel; x stays f32 in HBM).
    alpha_bf16 = jax.block_until_ready(
        attention_pallas(x, w1, b1, w2, b2, matmul_dtype=jnp.bfloat16))
    assert jnp.allclose(alpha_bf16, alpha_ref, atol=1e-2, rtol=1e-2), "bf16 path mismatch"

    print("KERNEL_OK")
</pallas_src>

<mosaic_0001>
module attributes {stable_mosaic.version = 11 : i64} {
  func.func @_attention_kernel(%arg0: i32, %arg1: memref<64x32xf32, #tpu.memory_space<vmem>>, %arg2: memref<32x32xf32, #tpu.memory_space<vmem>>, %arg3: memref<1x32xf32, #tpu.memory_space<vmem>>, %arg4: memref<1x32xf32, #tpu.memory_space<vmem>>, %arg5: memref<1x8x8xf32, #tpu.memory_space<vmem>>) attributes {dimension_semantics = [#tpu.dimension_semantics<parallel>], iteration_bounds = array<i64: 1>, scalar_prefetch = 0 : i64, scratch_operands = 0 : i64, tpu.core_type = #tpu.core_type<tc>, window_params = [{transform_indices = @transform_0, window_bounds = array<i64: 64, 32>}, {pipeline_mode = #tpu.pipeline_mode<synchronous>, transform_indices = @transform_1, window_bounds = array<i64: 32, 32>}, {pipeline_mode = #tpu.pipeline_mode<synchronous>, transform_indices = @transform_2, window_bounds = array<i64: 1, 32>}, {pipeline_mode = #tpu.pipeline_mode<synchronous>, transform_indices = @transform_3, window_bounds = array<i64: 1, 32>}, {transform_indices = @transform_4, window_bounds = array<i64: 1, 8, 8>}]} {
    %c0 = arith.constant 0 : index
    %c0_0 = arith.constant 0 : index
    %0 = vector.load %arg2[%c0, %c0_0] : memref<32x32xf32, #tpu.memory_space<vmem>>, vector<32x32xf32>
    %c0_1 = arith.constant 0 : index
    %c0_2 = arith.constant 0 : index
    %1 = vector.load %arg3[%c0_1, %c0_2] : memref<1x32xf32, #tpu.memory_space<vmem>>, vector<1x32xf32>
    %c0_3 = arith.constant 0 : index
    %c0_4 = arith.constant 0 : index
    %2 = vector.load %arg4[%c0_3, %c0_4] : memref<1x32xf32, #tpu.memory_space<vmem>>, vector<1x32xf32>
    %c0_5 = arith.constant 0 : index
    %c0_6 = arith.constant 0 : index
    %3 = vector.load %arg1[%c0_5, %c0_6] : memref<64x32xf32, #tpu.memory_space<vmem>>, vector<64x32xf32>
    %cst = arith.constant dense<0.000000e+00> : vector<64x32xf32>
    %4 = tpu.matmul %3, %0, %cst {dimension_numbers = #tpu.dot_dimension_numbers<[1], [0], [0], [1], [0, 0, 1, 1], [], []>} : vector<64x32xf32>, vector<32x32xf32>, vector<64x32xf32> -> vector<64x32xf32>
    %5 = vector.broadcast %1 : vector<1x32xf32> to vector<64x32xf32>
    %6 = arith.addf %4, %5 : vector<64x32xf32>
    %cst_7 = arith.constant 0.000000e+00 : f32
    %7 = vector.broadcast %cst_7 : f32 to vector<64x32xf32>
    %8 = arith.maximumf %6, %7 : vector<64x32xf32>
    %9 = vector.broadcast %2 : vector<1x32xf32> to vector<64x32xf32>
    %10 = arith.mulf %8, %9 : vector<64x32xf32>
    %11 = vector.shape_cast %10 : vector<64x32xf32> to vector<8x8x32xf32>
    %cst_8 = arith.constant dense<0.000000e+00> : vector<8x8xf32>
    %12 = vector.multi_reduction <add>, %11, %cst_8 [2] : vector<8x8x32xf32> to vector<8x8xf32>
    %cst_9 = arith.constant dense<0xFF800000> : vector<8xf32>
    %13 = vector.multi_reduction <maximumf>, %12, %cst_9 [1] : vector<8x8xf32> to vector<8xf32>
    %14 = vector.shape_cast %13 : vector<8xf32> to vector<8x1xf32>
    %15 = vector.broadcast %14 : vector<8x1xf32> to vector<8x8xf32>
    %16 = arith.subf %12, %15 : vector<8x8xf32>
    %17 = math.exp %16 : vector<8x8xf32>
    %cst_10 = arith.constant dense<0.000000e+00> : vector<8xf32>
    %18 = vector.multi_reduction <add>, %17, %cst_10 [1] : vector<8x8xf32> to vector<8xf32>
    %19 = vector.shape_cast %18 : vector<8xf32> to vector<8x1xf32>
    %20 = tpu.reciprocal %19 {approx = true} : vector<8x1xf32> -> vector<8x1xf32>
    %21 = vector.broadcast %20 : vector<8x1xf32> to vector<8x8xf32>
    %22 = arith.mulf %17, %21 : vector<8x8xf32>
    %c0_11 = arith.constant 0 : index
    %c0_12 = arith.constant 0 : index
    %c0_13 = arith.constant 0 : index
    %23 = vector.load %arg5[%c0_11, %c0_12, %c0_13] : memref<1x8x8xf32, #tpu.memory_space<vmem>>, vector<1x8x8xf32>
    %24 = vector.shape_cast %23 : vector<1x8x8xf32> to vector<8x8xf32>
    %25 = vector.shape_cast %22 : vector<8x8xf32> to vector<1x8x8xf32>
    tpu.vector_store %arg5[%c0_11, %c0_12, %c0_13], %25 {strides = array<i32>} : memref<1x8x8xf32, #tpu.memory_space<vmem>>, vector<1x8x8xf32>,
    return
  }
  func.func @transform_0(%arg0: i32) -> (i32, i32) {
    %c0_i32 = arith.constant 0 : i32
    %c0_i32_0 = arith.constant 0 : i32
    return %arg0, %c0_i32 : i32, i32
  }
  func.func @transform_1(%arg0: i32) -> (i32, i32) {
    %c0_i32 = arith.constant 0 : i32
    %c0_i32_0 = arith.constant 0 : i32
    %c0_i32_1 = arith.constant 0 : i32
    return %c0_i32, %c0_i32_0 : i32, i32
  }
  func.func @transform_2(%arg0: i32) -> (i32, i32) {
    %c0_i32 = arith.constant 0 : i32
    %c0_i32_0 = arith.constant 0 : i32
    %c0_i32_1 = arith.constant 0 : i32
    return %c0_i32, %c0_i32_0 : i32, i32
  }
  func.func @transform_3(%arg0: i32) -> (i32, i32) {
    %c0_i32 = arith.constant 0 : i32
    %c0_i32_0 = arith.constant 0 : i32
    %c0_i32_1 = arith.constant 0 : i32
    return %c0_i32, %c0_i32_0 : i32, i32
  }
  func.func @transform_4(%arg0: i32) -> (i32, i32, i32) {
    %c0_i32 = arith.constant 0 : i32
    %c0_i32_0 = arith.constant 0 : i32
    %c0_i32_1 = arith.constant 0 : i32
    return %arg0, %c0_i32, %c0_i32_0 : i32, i32, i32
  }
}

</mosaic_0001>

<llo_original>
// kernel: tpu_custom_call.1
$region0: #{tpu_custom_call.1}
  #allocation0 [shape = 'u32[]', space=smem, size = 0x4, offset = 0x4, fixed_abs, tag = 'smem constant byte address 0x4 - core index']
  #allocation1 [shape = 'u32[144,128]{1,0:T(1,128)}', space=vmem, size = 0x12000, scoped, tag = 'internal scratch']
  %s0 = inlined_call_operand.vmem [shape: f32[64,32], index: 0, kind: input, shape index: {}]
  %s1 = inlined_call_operand.vmem [shape: f32[32,32], index: 1, kind: input, shape index: {}]
  %s2 = inlined_call_operand.vmem [shape: f32[1,32], index: 2, kind: input, shape index: {}]
  %s3 = inlined_call_operand.vmem [shape: f32[1,32], index: 3, kind: input, shape index: {}]
  %s4 = inlined_call_operand.hbm [shape: f32[1,8,8], index: 4, kind: output, shape index: {}]
  %s5 = sld [smem:[#allocation0]]
  $region26: #{tpu_custom_call.1} parent=0
    _
  %s7 = ssub.s32 1, %s5
  %s8 = scalar_select 0, %s7, %s5
  $region1: #{tpu_custom_call.1} parent=0
    #allocation2 [shape = 'u8[4096]{0}', space=vmem, size = 0x1000, scoped, tag = 'output window, operand 0, single buffered']
    #allocation3 [shape = 's32[1]{0}', space=sflag, size = 0x4, scoped, tag = 'scoped memory for tpu_custom_call.1']
    %9 = vsyncpa [#allocation3], 0
    // Predicated region
    $region2: #{tpu_custom_call.1} parent=1 // pred_check
      _
    $region3: #{tpu_custom_call.1} parent=1 // pred_check_branch
      %11 = sbr.rel (0) target = $region5
    $region4: #{tpu_custom_call.1} parent=1 // pred_region
      _
    $region5: #{tpu_custom_call.1} parent=1 // pred_fallthru
      _
    // Predicated region
    $region6: #{tpu_custom_call.1} parent=1 // pred_check
      _
    $region7: #{tpu_custom_call.1} parent=1 // pred_check_branch
      %13 = sbr.rel (0) target = $region9
    $region8: #{tpu_custom_call.1} parent=1 // pred_region
      _
    $region9: #{tpu_custom_call.1} parent=1 // pred_fallthru
      _
    // Predicated region
    $region10: #{tpu_custom_call.1} parent=1 // pred_check
      _
    $region11: #{tpu_custom_call.1} parent=1 // pred_check_branch
      %15 = sbr.rel (0) target = $region13
    $region12: #{tpu_custom_call.1} parent=1 // pred_region
      _
    $region13: #{tpu_custom_call.1} parent=1 // pred_fallthru
      _
    // Predicated region
    $region14: #{tpu_custom_call.1} parent=1 // pred_check
      _
    $region15: #{tpu_custom_call.1} parent=1 // pred_check_branch
      %17 = sbr.rel (0) target = $region17
    $region16: #{tpu_custom_call.1} parent=1 // pred_region
      _
    $region17: #{tpu_custom_call.1} parent=1 // pred_fallthru
      _
    %v18 = vld [vmem:[%s1] sm:$0xff]
    %v19 = vld [vmem:[%s1 + $0x8] sm:$0xff]
    %v20 = vld [vmem:[%s1 + $0x10] sm:$0xff]
    %v21 = vld [vmem:[%s1 + $0x18] sm:$0xff]
    %v22 = vld [vmem:[%s2] sm:$0x1]
    %v23 = vld [vmem:[%s3] sm:$0x1]
    %v24 = vld [vmem:[%s0] sm:$0xff]
    %v25 = vld [vmem:[%s0 + $0x8] sm:$0xff]
    %v26 = vld [vmem:[%s0 + $0x10] sm:$0xff]
    %v27 = vld [vmem:[%s0 + $0x18] sm:$0xff]
    %v28 = vld [vmem:[%s0 + $0x20] sm:$0xff]
    %v29 = vld [vmem:[%s0 + $0x28] sm:$0xff]
    %v30 = vld [vmem:[%s0 + $0x30] sm:$0xff]
    %v31 = vld [vmem:[%s0 + $0x38] sm:$0xff]
    %v33 = vlaneseq
    %v34 = vshrl.u32 %v33, 7
    %v35 = vsub.s32 0, %v34
    %v36 = vrot.slane %v22, %v35
    %vm38 = vcmask 261120
    %v40 = vsel %vm38, %v24, 0
    %v43 = vsel %vm38, %v25, 0
    %v46 = vsel %vm38, %v26, 0
    %v49 = vsel %vm38, %v27, 0
    %v52 = vsel %vm38, %v28, 0
    %v55 = vsel %vm38, %v29, 0
    %v58 = vsel %vm38, %v30, 0
    %v61 = vsel %vm38, %v31, 0
    %63 = vmatprep.subr.mxu0 0.0
    %64 = vmatpush1.msra.mxu0 0.0
    %65 = vmatprep.subr.mxu0 0.0
    %66 = vmatpush1.msra.mxu0 0.0
    %67 = vmatprep.subr.mxu0 0.0
    %68 = vmatpush1.msra.mxu0 0.0
    %69 = vmatprep.subr.mxu0 0.0
    %70 = vmatpush1.msra.mxu0 0.0
    %71 = vmatprep.subr.mxu0 0.0
    %72 = vmatpush1.msra.mxu0 0.0
    %73 = vmatprep.subr.mxu0 0.0
    %74 = vmatpush1.msra.mxu0 0.0
    %75 = vmatprep.subr.mxu0 0.0
    %76 = vmatpush1.msra.mxu0 0.0
    %77 = vmatprep.subr.mxu0 0.0
    %78 = vmatpush1.msra.mxu0 0.0
    %79 = vmatprep.subr.mxu0 0.0
    %80 = vmatpush1.msra.mxu0 0.0
    %81 = vmatprep.subr.mxu0 0.0
    %82 = vmatpush1.msra.mxu0 0.0
    %83 = vmatprep.subr.mxu0 0.0
    %84 = vmatpush1.msra.mxu0 0.0
    %85 = vmatprep.subr.mxu0 0.0
    %86 = vmatpush1.msra.mxu0 0.0
    %87 = vmatprep.subr.mxu0 0.0
    %88 = vmatpush1.msra.mxu0 %v21
    %89 = vmatprep.subr.mxu0 0.0
    %90 = vmatpush1.msra.mxu0 %v20
    %91 = vmatprep.subr.mxu0 0.0
    %92 = vmatpush1.msra.mxu0 %v19
    %93 = vmatprep.subr.mxu0 0.0
    %94 = vmatpush1.msra.mxu0 %v18
    %95 = vmatprep.subr.mxu0 0.0
    %96 = vmatpush2.msra.mxu0 0.0
    %97 = vmatprep.subr.mxu0 0.0
    %98 = vmatpush2.msra.mxu0 0.0
    %99 = vmatprep.subr.mxu0 0.0
    %100 = vmatpush2.msra.mxu0 0.0
    %101 = vmatprep.subr.mxu0 0.0
    %102 = vmatpush2.msra.mxu0 0.0
    %103 = vmatprep.subr.mxu0 0.0
    %104 = vmatpush2.msra.mxu0 0.0
    %105 = vmatprep.subr.mxu0 0.0
    %106 = vmatpush2.msra.mxu0 0.0
    %107 = vmatprep.subr.mxu0 0.0
    %108 = vmatpush2.msra.mxu0 0.0
    %109 = vmatprep.subr.mxu0 0.0
    %110 = vmatpush2.msra.mxu0 0.0
    %111 = vmatprep.subr.mxu0 0.0
    %112 = vmatpush2.msra.mxu0 0.0
    %113 = vmatprep.subr.mxu0 0.0
    %114 = vmatpush2.msra.mxu0 0.0
    %115 = vmatprep.subr.mxu0 0.0
    %116 = vmatpush2.msra.mxu0 0.0
    %117 = vmatprep.subr.mxu0 0.0
    %118 = vmatpush2.msra.mxu0 0.0
    %119 = vmatprep.subr.mxu0 0.0
    %120 = vmatpush2.msra.mxu0 0.0
    %121 = vmatprep.subr.mxu0 0.0
    %122 = vmatpush2.msra.mxu0 0.0
    %123 = vmatprep.subr.mxu0 0.0
    %124 = vmatpush2.msra.mxu0 0.0
    %125 = vmatprep.subr.mxu0 0.0
    %126 = vmatpush2.msra.mxu0 0.0
    %127 = vmatprep.mubr.f32.mxu0 0.0
    %128 = vmatmul.mubr.f32.gmra.mxu0 %v40
    %v129 = vpop.f32.mrf.mxu0
    %v130 = vadd.f32 %v36, %v129
    %v131 = vpop.f32.mrf.mxu0
    %132 = vmatprep.mubr.f32.mxu0 0.0
    %133 = vmatmul.mubr.f32.gmra.mxu0 %v43
    %v134 = vpop.f32.mrf.mxu0
    %v135 = vadd.f32 %v36, %v134
    %v136 = vpop.f32.mrf.mxu0
    %137 = vmatprep.mubr.f32.mxu0 0.0
    %138 = vmatmul.mubr.f32.gmra.mxu0 %v46
    %v139 = vpop.f32.mrf.mxu0
    %v140 = vadd.f32 %v36, %v139
    %v141 = vpop.f32.mrf.mxu0
    %142 = vmatprep.mubr.f32.mxu0 0.0
    %143 = vmatmul.mubr.f32.gmra.mxu0 %v49
    %v144 = vpop.f32.mrf.mxu0
    %v145 = vadd.f32 %v36, %v144
    %v146 = vpop.f32.mrf.mxu0
    %147 = vmatprep.mubr.f32.mxu0 0.0
    %148 = vmatmul.mubr.f32.gmra.mxu0 %v52
    %v149 = vpop.f32.mrf.mxu0
    %v150 = vadd.f32 %v36, %v149
    %v151 = vpop.f32.mrf.mxu0
    %152 = vmatprep.mubr.f32.mxu0 0.0
    %153 = vmatmul.mubr.f32.gmra.mxu0 %v55
    %v154 = vpop.f32.mrf.mxu0
    %v155 = vadd.f32 %v36, %v154
    %v156 = vpop.f32.mrf.mxu0
    %157 = vmatprep.mubr.f32.mxu0 0.0
    %158 = vmatmul.mubr.f32.gmra.mxu0 %v58
    %v159 = vpop.f32.mrf.mxu0
    %v160 = vadd.f32 %v36, %v159
    %v161 = vpop.f32.mrf.mxu0
    %162 = vmatprep.mubr.f32.mxu0 0.0
    %163 = vmatmul.mubr.f32.gmra.mxu0 %v61
    %v164 = vpop.f32.mrf.mxu0
    %v165 = vadd.f32 %v36, %v164
    %v166 = vpop.f32.mrf.mxu0
    %167 = vdwg.mxu0
    %v168 = vmax.f32 %v130, 0.0
    %v169 = vmax.f32 %v135, 0.0
    %v170 = vmax.f32 %v140, 0.0
    %v171 = vmax.f32 %v145, 0.0
    %v172 = vmax.f32 %v150, 0.0
    %v173 = vmax.f32 %v155, 0.0
    %v174 = vmax.f32 %v160, 0.0
    %v175 = vmax.f32 %v165, 0.0
    %v177 = vlaneseq
    %v178 = vshrl.u32 %v177, 7
    %v179 = vsub.s32 0, %v178
    %v180 = vrot.slane %v23, %v179
    %v182 = vmul.f32 %v168, %v180
    %v183 = vmul.f32 %v169, %v180
    %v184 = vmul.f32 %v170, %v180
    %v185 = vmul.f32 %v171, %v180
    %v186 = vmul.f32 %v172, %v180
    %v187 = vmul.f32 %v173, %v180
    %v188 = vmul.f32 %v174, %v180
    %v189 = vmul.f32 %v175, %v180
    %v190 = vsel %vm38, %v182, 0.0
    %191 = vadd.xlane.f32.xlu0 %v190
    %v192 = vpop.xlane.xlu0 %191
    %v193 = vsel %vm38, %v183, 0.0
    %194 = vadd.xlane.f32.xlu0 %v193
    %v195 = vpop.xlane.xlu0 %194
    %v196 = vsel %vm38, %v184, 0.0
    %197 = vadd.xlane.f32.xlu0 %v196
    %v198 = vpop.xlane.xlu0 %197
    %v199 = vsel %vm38, %v185, 0.0
    %200 = vadd.xlane.f32.xlu0 %v199
    %v201 = vpop.xlane.xlu0 %200
    %v202 = vsel %vm38, %v186, 0.0
    %203 = vadd.xlane.f32.xlu0 %v202
    %v204 = vpop.xlane.xlu0 %203
    %v205 = vsel %vm38, %v187, 0.0
    %206 = vadd.xlane.f32.xlu0 %v205
    %v207 = vpop.xlane.xlu0 %206
    %v208 = vsel %vm38, %v188, 0.0
    %209 = vadd.xlane.f32.xlu0 %v208
    %v210 = vpop.xlane.xlu0 %209
    %v211 = vsel %vm38, %v189, 0.0
    %212 = vadd.xlane.f32.xlu0 %v211
    %v213 = vpop.xlane.xlu0 %212
    %v222 = vlaneseq
    %v223 = vand.u32 %v222, 127
    %v224 = vlaneseq
    %v225 = vshrl.u32 %v224, 7
    %v226 = vsub.s32 %v223, %v225
    %v227 = vrot.slane %v192, %v226
    %v228 = vlaneseq
    %v229 = vshrl.u32 %v228, 7
    %v230 = vsub.s32 %v223, %v229
    %v231 = vrot.slane %v195, %v230
    %v232 = vlaneseq
    %v233 = vshrl.u32 %v232, 7
    %v234 = vsub.s32 %v223, %v233
    %v235 = vrot.slane %v198, %v234
    %v236 = vlaneseq
    %v237 = vshrl.u32 %v236, 7
    %v238 = vsub.s32 %v223, %v237
    %v239 = vrot.slane %v201, %v238
    %v240 = vlaneseq
    %v241 = vshrl.u32 %v240, 7
    %v242 = vsub.s32 %v223, %v241
    %v243 = vrot.slane %v204, %v242
    %v244 = vlaneseq
    %v245 = vshrl.u32 %v244, 7
    %v246 = vsub.s32 %v223, %v245
    %v247 = vrot.slane %v207, %v246
    %v248 = vlaneseq
    %v249 = vshrl.u32 %v248, 7
    %v250 = vsub.s32 %v223, %v249
    %v251 = vrot.slane %v210, %v250
    %v252 = vlaneseq
    %v253 = vshrl.u32 %v252, 7
    %v254 = vsub.s32 %v223, %v253
    %v255 = vrot.slane %v213, %v254
    %vm256 = vcmask 1041409
    %v257 = vsel %vm256, %v231, %v227
    %vm258 = vcmask 1042434
    %v259 = vsel %vm258, %v235, %v257
    %vm260 = vcmask 1043459
    %v261 = vsel %vm260, %v239, %v259
    %vm262 = vcmask 1044484
    %v263 = vsel %vm262, %v243, %v261
    %vm264 = vcmask 1045509
    %v265 = vsel %vm264, %v247, %v263
    %vm266 = vcmask 1046534
    %v267 = vsel %vm266, %v251, %v265
    %vm268 = vcmask 1047559
    %v269 = vsel %vm268, %v255, %v267
    %vm271 = vcmask 64512
    %v272 = vsel %vm271, %v269, -inf
    %273 = vmax.xlane.f32.xlu0 %v272
    %v274 = vpop.xlane.xlu0 %273
    %v276 = vlaneseq
    %v277 = vshrl.u32 %v276, 7
    %v278 = vsub.s32 0, %v277
    %v279 = vrot.slane %v274, %v278
    %v280 = vlaneseq
    %v281 = vshrl.u32 %v280, 7
    %v282 = vsub.s32 1, %v281
    %v283 = vrot.slane %v274, %v282
    %v284 = vlaneseq
    %v285 = vshrl.u32 %v284, 7
    %v286 = vsub.s32 2, %v285
    %v287 = vrot.slane %v274, %v286
    %v288 = vlaneseq
    %v289 = vshrl.u32 %v288, 7
    %v290 = vsub.s32 3, %v289
    %v291 = vrot.slane %v274, %v290
    %v292 = vlaneseq
    %v293 = vshrl.u32 %v292, 7
    %v294 = vsub.s32 4, %v293
    %v295 = vrot.slane %v274, %v294
    %v296 = vlaneseq
    %v297 = vshrl.u32 %v296, 7
    %v298 = vsub.s32 5, %v297
    %v299 = vrot.slane %v274, %v298
    %v300 = vlaneseq
    %v301 = vshrl.u32 %v300, 7
    %v302 = vsub.s32 6, %v301
    %v303 = vrot.slane %v274, %v302
    %v304 = vlaneseq
    %v305 = vshrl.u32 %v304, 7
    %v306 = vsub.s32 7, %v305
    %v307 = vrot.slane %v274, %v306
    %v316 = vsub.f32 %v192, %v279
    %v317 = vsub.f32 %v195, %v283
    %v318 = vsub.f32 %v198, %v287
    %v319 = vsub.f32 %v201, %v291
    %v320 = vsub.f32 %v204, %v295
    %v321 = vsub.f32 %v207, %v299
    %v322 = vsub.f32 %v210, %v303
    %v323 = vsub.f32 %v213, %v307
    %v324 = vmul.f32 %v316, 1.442695
    %v325 = vpow.pop %v324
    %v326 = vmul.f32 %v317, 1.442695
    %v327 = vpow.pop %v326
    %v328 = vmul.f32 %v318, 1.442695
    %v329 = vpow.pop %v328
    %v330 = vmul.f32 %v319, 1.442695
    %v331 = vpow.pop %v330
    %v332 = vmul.f32 %v320, 1.442695
    %v333 = vpow.pop %v332
    %v334 = vmul.f32 %v321, 1.442695
    %v335 = vpow.pop %v334
    %v336 = vmul.f32 %v322, 1.442695
    %v337 = vpow.pop %v336
    %v338 = vmul.f32 %v323, 1.442695
    %v339 = vpow.pop %v338
    %348 = vset.pattern.permute.xlu0 0
    %349 = vperm.xlu0 %348, %v325
    %v350 = vpop.permute.xlu0 %349
    %351 = vset.pattern.permute.xlu0 0
    %352 = vperm.xlu0 %351, %v327
    %v353 = vpop.permute.xlu0 %352
    %354 = vset.pattern.permute.xlu0 0
    %355 = vperm.xlu0 %354, %v329
    %v356 = vpop.permute.xlu0 %355
    %357 = vset.pattern.permute.xlu0 0
    %358 = vperm.xlu0 %357, %v331
    %v359 = vpop.permute.xlu0 %358
    %360 = vset.pattern.permute.xlu0 0
    %361 = vperm.xlu0 %360, %v333
    %v362 = vpop.permute.xlu0 %361
    %363 = vset.pattern.permute.xlu0 0
    %364 = vperm.xlu0 %363, %v335
    %v365 = vpop.permute.xlu0 %364
    %366 = vset.pattern.permute.xlu0 0
    %367 = vperm.xlu0 %366, %v337
    %v368 = vpop.permute.xlu0 %367
    %369 = vset.pattern.permute.xlu0 0
    %370 = vperm.xlu0 %369, %v339
    %v371 = vpop.permute.xlu0 %370
    %v372 = vlaneseq
    %v373 = vshrl.u32 %v372, 7
    %v374 = vsub.s32 %v223, %v373
    %v375 = vrot.slane %v350, %v374
    %v376 = vlaneseq
    %v377 = vshrl.u32 %v376, 7
    %v378 = vsub.s32 %v223, %v377
    %v379 = vrot.slane %v353, %v378
    %v380 = vlaneseq
    %v381 = vshrl.u32 %v380, 7
    %v382 = vsub.s32 %v223, %v381
    %v383 = vrot.slane %v356, %v382
    %v384 = vlaneseq
    %v385 = vshrl.u32 %v384, 7
    %v386 = vsub.s32 %v223, %v385
    %v387 = vrot.slane %v359, %v386
    %v388 = vlaneseq
    %v389 = vshrl.u32 %v388, 7
    %v390 = vsub.s32 %v223, %v389
    %v391 = vrot.slane %v362, %v390
    %v392 = vlaneseq
    %v393 = vshrl.u32 %v392, 7
    %v394 = vsub.s32 %v223, %v393
    %v395 = vrot.slane %v365, %v394
    %v396 = vlaneseq
    %v397 = vshrl.u32 %v396, 7
    %v398 = vsub.s32 %v223, %v397
    %v399 = vrot.slane %v368, %v398
    %v400 = vlaneseq
    %v401 = vshrl.u32 %v400, 7
    %v402 = vsub.s32 %v223, %v401
    %v403 = vrot.slane %v371, %v402
    %v404 = vsel %vm256, %v379, %v375
    %v405 = vsel %vm258, %v383, %v404
    %v406 = vsel %vm260, %v387, %v405
    %v407 = vsel %vm262, %v391, %v406
    %v408 = vsel %vm264, %v395, %v407
    %v409 = vsel %vm266, %v399, %v408
    %v410 = vsel %vm268, %v403, %v409
    %v412 = vsel %vm271, %v410, 0.0
    %413 = vadd.xlane.f32.xlu0 %v412
    %v414 = vpop.xlane.xlu0 %413
    %v415 = vrcp.pop %v414
    %v417 = vlaneseq
    %v418 = vshrl.u32 %v417, 7
    %v419 = vsub.s32 0, %v418
    %v420 = vrot.slane %v415, %v419
    %v421 = vlaneseq
    %v422 = vshrl.u32 %v421, 7
    %v423 = vsub.s32 1, %v422
    %v424 = vrot.slane %v415, %v423
    %v425 = vlaneseq
    %v426 = vshrl.u32 %v425, 7
    %v427 = vsub.s32 2, %v426
    %v428 = vrot.slane %v415, %v427
    %v429 = vlaneseq
    %v430 = vshrl.u32 %v429, 7
    %v431 = vsub.s32 3, %v430
    %v432 = vrot.slane %v415, %v431
    %v433 = vlaneseq
    %v434 = vshrl.u32 %v433, 7
    %v435 = vsub.s32 4, %v434
    %v436 = vrot.slane %v415, %v435
    %v437 = vlaneseq
    %v438 = vshrl.u32 %v437, 7
    %v439 = vsub.s32 5, %v438
    %v440 = vrot.slane %v415, %v439
    %v441 = vlaneseq
    %v442 = vshrl.u32 %v441, 7
    %v443 = vsub.s32 6, %v442
    %v444 = vrot.slane %v415, %v443
    %v445 = vlaneseq
    %v446 = vshrl.u32 %v445, 7
    %v447 = vsub.s32 7, %v446
    %v448 = vrot.slane %v415, %v447
    %v457 = vmul.f32 %v325, %v420
    %v458 = vmul.f32 %v327, %v424
    %v459 = vmul.f32 %v329, %v428
    %v460 = vmul.f32 %v331, %v432
    %v461 = vmul.f32 %v333, %v436
    %v462 = vmul.f32 %v335, %v440
    %v463 = vmul.f32 %v337, %v444
    %v464 = vmul.f32 %v339, %v448
    %473 = vset.pattern.permute.xlu0 0
    %474 = vperm.xlu0 %473, %v457
    %v475 = vpop.permute.xlu0 %474
    %476 = vset.pattern.permute.xlu0 0
    %477 = vperm.xlu0 %476, %v458
    %v478 = vpop.permute.xlu0 %477
    %479 = vset.pattern.permute.xlu0 0
    %480 = vperm.xlu0 %479, %v459
    %v481 = vpop.permute.xlu0 %480
    %482 = vset.pattern.permute.xlu0 0
    %483 = vperm.xlu0 %482, %v460
    %v484 = vpop.permute.xlu0 %483
    %485 = vset.pattern.permute.xlu0 0
    %486 = vperm.xlu0 %485, %v461
    %v487 = vpop.permute.xlu0 %486
    %488 = vset.pattern.permute.xlu0 0
    %489 = vperm.xlu0 %488, %v462
    %v490 = vpop.permute.xlu0 %489
    %491 = vset.pattern.permute.xlu0 0
    %492 = vperm.xlu0 %491, %v463
    %v493 = vpop.permute.xlu0 %492
    %494 = vset.pattern.permute.xlu0 0
    %495 = vperm.xlu0 %494, %v464
    %v496 = vpop.permute.xlu0 %495
    %v497 = vlaneseq
    %v498 = vshrl.u32 %v497, 7
    %v499 = vsub.s32 %v223, %v498
    %v500 = vrot.slane %v475, %v499
    %v501 = vlaneseq
    %v502 = vshrl.u32 %v501, 7
    %v503 = vsub.s32 %v223, %v502
    %v504 = vrot.slane %v478, %v503
    %v505 = vlaneseq
    %v506 = vshrl.u32 %v505, 7
    %v507 = vsub.s32 %v223, %v506
    %v508 = vrot.slane %v481, %v507
    %v509 = vlaneseq
    %v510 = vshrl.u32 %v509, 7
    %v511 = vsub.s32 %v223, %v510
    %v512 = vrot.slane %v484, %v511
    %v513 = vlaneseq
    %v514 = vshrl.u32 %v513, 7
    %v515 = vsub.s32 %v223, %v514
    %v516 = vrot.slane %v487, %v515
    %v517 = vlaneseq
    %v518 = vshrl.u32 %v517, 7
    %v519 = vsub.s32 %v223, %v518
    %v520 = vrot.slane %v490, %v519
    %v521 = vlaneseq
    %v522 = vshrl.u32 %v521, 7
    %v523 = vsub.s32 %v223, %v522
    %v524 = vrot.slane %v493, %v523
    %v525 = vlaneseq
    %v526 = vshrl.u32 %v525, 7
    %v527 = vsub.s32 %v223, %v526
    %v528 = vrot.slane %v496, %v527
    %v529 = vsel %vm256, %v504, %v500
    %v530 = vsel %vm258, %v508, %v529
    %v531 = vsel %vm260, %v512, %v530
    %v532 = vsel %vm262, %v516, %v531
    %v533 = vsel %vm264, %v520, %v532
    %v534 = vsel %vm266, %v524, %v533
    %v535 = vsel %vm268, %v528, %v534
    %537 = vst.msk [vmem:[#allocation2] sm:$0xff] %vm271, %v535
    // Predicated region
    $region18: #{tpu_custom_call.1} parent=1 // pred_check
      _
    $region19: #{tpu_custom_call.1} parent=1 // pred_check_branch
      %539 = sbr.rel (0) target = $region21
    $region20: #{tpu_custom_call.1} parent=1 // pred_region
      %s541 = ssub.s32 128, 128
      %542 = vsyncadd [#allocation3], %s541
      %s544 = sshll.u32 [#allocation2], 4
      %s545 = int_to_ptr.vmem [resolvable:$true] %s544
      %547 = dma.vmem_to_hbm [thread:$0]  %s545, 128, %s4, [#allocation3]
    $region21: #{tpu_custom_call.1} parent=1 // pred_fallthru
      _
    // Predicated region
    $region22: #{tpu_custom_call.1} parent=1 // pred_check
      _
    $region23: #{tpu_custom_call.1} parent=1 // pred_check_branch
      %549 = sbr.rel (0) target = $region25
    $region24: #{tpu_custom_call.1} parent=1 // pred_region
      %550 = dma.done [#allocation3], 128
    $region25: #{tpu_custom_call.1} parent=1 // pred_fallthru
      _
    %551 = vsyncpa [#allocation3], 1

</llo_original>
